<compile_context>
chip_gen: v5e
topology: v5e:2x2
jax: 0.10.0
libtpu: 0.0.40
codegen_flags: <defaults>
</compile_context>

<pallas_src>
import jax
import jax.numpy as jnp
from jax.experimental import pallas as pl
from jax.experimental.pallas import tpu as pltpu

_LANES = 128


def _round_up(a: int, b: int) -> int:
    return ((a + b - 1) // b) * b


def _sse_kernel(img_ref, clean_ref, out_ref, acc_ref):
    """Accumulate per-image sum of squared error over the row-block axis.

    img_ref, clean_ref : (B, tR, 128) VMEM blocks in native dtype (cast here)
    out_ref            : (B, 128) block of the (P, B, 128) partial-SSE output
    acc_ref            : (B, tR, 128) f32 VMEM scratch accumulator
    """
    k = pl.program_id(1)

    @pl.when(k == 0)
    def _init():
        acc_ref[...] = jnp.zeros_like(acc_ref)

    d = clean_ref[...].astype(jnp.float32) - img_ref[...].astype(jnp.float32)
    acc_ref[...] += d * d  # steady state: DMA + VPU only

    @pl.when(k == pl.num_programs(1) - 1)
    def _finalize():
        # One sublane reduce per shard; the lane reduce, log10 and batch mean
        # are O(B * 128) and finished in the wrapper.
        out_ref[...] = jnp.sum(acc_ref[...], axis=1)


def batch_psnr(img, imclean, data_range, *, block_rows=256, num_shards=2,
               vmem_budget_bytes=12 * 1024 * 1024):
    """JAX/Pallas equivalent of the PyTorch batch_psnr module forward."""
    B = img.shape[0]
    N = 1
    for d in img.shape[1:]:
        N *= d

    # Native dtype all the way to the kernel (no wrapper-side f32 copy in HBM).
    x = img.reshape(B, N)
    y = imclean.reshape(B, N)

    isx = jnp.dtype(x.dtype).itemsize
    isy = jnp.dtype(y.dtype).itemsize
    # Sublane packing granularity of the most tightly packed input dtype
    # (f32 -> 8, bf16 -> 16, int8/u8/fp8 -> 32).
    sub = 8 * (4 // min(isx, isy, 4))

    # Rows of 128 lanes per image.
    R = pl.cdiv(N, _LANES)

    # Row-block size: keep (2 inputs x 2 pipeline buffers) + f32 accumulator
    # within a conservative VMEM budget valid on v5e / v6e / v7x.
    bytes_per_row = B * _LANES * (2 * (isx + isy) + 4)
    tr_cap = max(sub, (vmem_budget_bytes // bytes_per_row) // 32 * 32)
    tR = min(block_rows, tr_cap)
    tR = max(sub, (tR // sub) * sub)

    R_sub = _round_up(R, sub)
    if R_sub <= tR:
        tR = R_sub  # whole (padded) image fits in a single block

    nblk = pl.cdiv(R_sub, tR)
    P = max(1, min(num_shards, nblk))   # leading "parallel" axis (megacore)
    nblk = _round_up(nblk, P)
    num_k = nblk // P
    R_pad = nblk * tR
    N_pad = R_pad * _LANES

    if N_pad != N:
        # Zero padding on both inputs contributes 0 to the squared-error sum.
        x = jnp.pad(x, ((0, 0), (0, N_pad - N)))
        y = jnp.pad(y, ((0, 0), (0, N_pad - N)))

    x = x.reshape(B, R_pad, _LANES)
    y = y.reshape(B, R_pad, _LANES)

    in_map = lambda p, k: (0, p * num_k + k, 0)

    partial_sse = pl.pallas_call(
        _sse_kernel,
        out_shape=jax.ShapeDtypeStruct((P, B, _LANES), jnp.float32),
        grid=(P, num_k),
        in_specs=[
            pl.BlockSpec((B, tR, _LANES), in_map),   # img (noisy)
            pl.BlockSpec((B, tR, _LANES), in_map),   # imclean
        ],
        out_specs=pl.BlockSpec((None, B, _LANES), lambda p, k: (p, 0, 0)),
        scratch_shapes=[pltpu.VMEM((B, tR, _LANES), jnp.float32)],
        compiler_params=pltpu.CompilerParams(
            dimension_semantics=("parallel", "arbitrary")),
        cost_estimate=pl.CostEstimate(
            flops=3 * B * N_pad,
            transcendentals=0,
            bytes_accessed=x.nbytes + y.nbytes + P * B * _LANES * 4),
    )(x, y)

    # Tiny O(B) epilogue in plain JAX (per review: kernel emits per-shard SSE).
    sse = jnp.sum(partial_sse, axis=(0, 2))          # (B,)
    mse = sse / jnp.float32(N)
    dr = jnp.asarray(data_range, dtype=jnp.float32)
    # Note: mse == 0 (identical images) yields +inf PSNR, matching skimage.
    psnr = 10.0 * jnp.log10(dr * dr / mse)           # (B,)
    return jnp.mean(psnr)


if __name__ == "__main__":
    key = jax.random.PRNGKey(0)
    k1, k2 = jax.random.split(key)

    # Small shapes consistent with the module: NCHW images.
    B, C, H, W = 2, 4, 16, 16
    clean = jax.random.uniform(k1, (B, C, H, W), dtype=jnp.float32)
    noise = 0.05 * jax.random.normal(k2, (B, C, H, W), dtype=jnp.float32)
    noisy = clean + noise
    data_range = 1.0

    psnr = batch_psnr(noisy, clean, data_range)
    psnr = jax.block_until_ready(psnr)

    # Reference (pure JAX, mirrors skimage compare_psnr per image + batch mean).
    def ref_psnr(noisy_x, clean_x, dr):
        d = (clean_x - noisy_x).reshape(clean_x.shape[0], -1).astype(jnp.float32)
        mse = jnp.mean(d * d, axis=-1)
        return jnp.mean(10.0 * jnp.log10(dr * dr / mse))

    ref = ref_psnr(noisy, clean, data_range)
    assert jnp.allclose(psnr, ref, rtol=1e-5, atol=1e-5), (psnr, ref)

    # Second check exercising the tiled path: multiple row blocks, 2 parallel
    # shards, and zero padding of the flattened image.
    k3, k4 = jax.random.split(k2)
    B2, C2, H2, W2 = 2, 3, 64, 96
    clean2 = jax.random.uniform(k3, (B2, C2, H2, W2), dtype=jnp.float32)
    noisy2 = clean2 + 0.1 * jax.random.normal(k4, (B2, C2, H2, W2),
                                              dtype=jnp.float32)
    psnr2 = jax.block_until_ready(
        batch_psnr(noisy2, clean2, data_range, block_rows=32, num_shards=2))
    ref2 = ref_psnr(noisy2, clean2, data_range)
    assert jnp.allclose(psnr2, ref2, rtol=1e-5, atol=1e-5), (psnr2, ref2)

    print("KERNEL_OK")
</pallas_src>

<mosaic_0001>
module attributes {stable_mosaic.version = 11 : i64} {
  func.func @_sse_kernel(%arg0: i32, %arg1: i32, %arg2: memref<2x8x128xf32, #tpu.memory_space<vmem>>, %arg3: memref<2x8x128xf32, #tpu.memory_space<vmem>>, %arg4: memref<1x2x128xf32, #tpu.memory_space<vmem>>, %arg5: memref<2x8x128xf32, #tpu.memory_space<vmem>>) attributes {dimension_semantics = [#tpu.dimension_semantics<parallel>, #tpu.dimension_semantics<arbitrary>], iteration_bounds = array<i64: 1, 1>, scalar_prefetch = 0 : i64, scratch_operands = 1 : i64, tpu.core_type = #tpu.core_type<tc>, window_params = [{transform_indices = @transform_0, window_bounds = array<i64: 2, 8, 128>}, {transform_indices = @transform_1, window_bounds = array<i64: 2, 8, 128>}, {transform_indices = @transform_2, window_bounds = array<i64: 1, 2, 128>}]} {
    %c0_i32 = arith.constant 0 : i32
    %0 = arith.cmpi eq, %arg1, %c0_i32 : i32
    %1 = arith.extui %0 : i1 to i32
    %c0_i32_0 = arith.constant 0 : i32
    %2 = arith.cmpi ne, %1, %c0_i32_0 : i32
    scf.if %2 {
      %cst = arith.constant 0.000000e+00 : f32
      %13 = vector.broadcast %cst : f32 to vector<2x8x128xf32>
      %c0_14 = arith.constant 0 : index
      %c0_15 = arith.constant 0 : index
      %c0_16 = arith.constant 0 : index
      %14 = vector.load %arg5[%c0_14, %c0_15, %c0_16] : memref<2x8x128xf32, #tpu.memory_space<vmem>>, vector<2x8x128xf32>
      tpu.vector_store %arg5[%c0_14, %c0_15, %c0_16], %13 {strides = array<i32>} : memref<2x8x128xf32, #tpu.memory_space<vmem>>, vector<2x8x128xf32>,
    } else {
    }
    %c0 = arith.constant 0 : index
    %c0_1 = arith.constant 0 : index
    %c0_2 = arith.constant 0 : index
    %3 = vector.load %arg3[%c0, %c0_1, %c0_2] : memref<2x8x128xf32, #tpu.memory_space<vmem>>, vector<2x8x128xf32>
    %c0_3 = arith.constant 0 : index
    %c0_4 = arith.constant 0 : index
    %c0_5 = arith.constant 0 : index
    %4 = vector.load %arg2[%c0_3, %c0_4, %c0_5] : memref<2x8x128xf32, #tpu.memory_space<vmem>>, vector<2x8x128xf32>
    %5 = arith.subf %3, %4 : vector<2x8x128xf32>
    %c0_6 = arith.constant 0 : index
    %c0_7 = arith.constant 0 : index
    %c0_8 = arith.constant 0 : index
    %6 = vector.load %arg5[%c0_6, %c0_7, %c0_8] : memref<2x8x128xf32, #tpu.memory_space<vmem>>, vector<2x8x128xf32>
    %7 = arith.mulf %5, %5 : vector<2x8x128xf32>
    %8 = arith.addf %6, %7 : vector<2x8x128xf32>
    %c0_9 = arith.constant 0 : index
    %c0_10 = arith.constant 0 : index
    %c0_11 = arith.constant 0 : index
    %9 = vector.load %arg5[%c0_9, %c0_10, %c0_11] : memref<2x8x128xf32, #tpu.memory_space<vmem>>, vector<2x8x128xf32>
    tpu.vector_store %arg5[%c0_9, %c0_10, %c0_11], %8 {strides = array<i32>} : memref<2x8x128xf32, #tpu.memory_space<vmem>>, vector<2x8x128xf32>,
    %c0_i32_12 = arith.constant 0 : i32
    %10 = arith.cmpi eq, %arg1, %c0_i32_12 : i32
    %11 = arith.extui %10 : i1 to i32
    %c0_i32_13 = arith.constant 0 : i32
    %12 = arith.cmpi ne, %11, %c0_i32_13 : i32
    scf.if %12 {
      %c0_14 = arith.constant 0 : index
      %c0_15 = arith.constant 0 : index
      %c0_16 = arith.constant 0 : index
      %13 = vector.load %arg5[%c0_14, %c0_15, %c0_16] : memref<2x8x128xf32, #tpu.memory_space<vmem>>, vector<2x8x128xf32>
      %cst = arith.constant dense<0.000000e+00> : vector<2x128xf32>
      %14 = vector.multi_reduction <add>, %13, %cst [1] : vector<2x8x128xf32> to vector<2x128xf32>
      %c0_17 = arith.constant 0 : index
      %c0_18 = arith.constant 0 : index
      %c0_19 = arith.constant 0 : index
      %15 = vector.load %arg4[%c0_17, %c0_18, %c0_19] : memref<1x2x128xf32, #tpu.memory_space<vmem>>, vector<1x2x128xf32>
      %16 = vector.shape_cast %15 : vector<1x2x128xf32> to vector<2x128xf32>
      %17 = vector.shape_cast %14 : vector<2x128xf32> to vector<1x2x128xf32>
      tpu.vector_store %arg4[%c0_17, %c0_18, %c0_19], %17 {strides = array<i32>} : memref<1x2x128xf32, #tpu.memory_space<vmem>>, vector<1x2x128xf32>,
    } else {
    }
    return
  }
  func.func @transform_0(%arg0: i32, %arg1: i32) -> (i32, i32, i32) {
    %c1_i32 = arith.constant 1 : i32
    %0 = arith.muli %arg0, %c1_i32 : i32
    %1 = arith.addi %0, %arg1 : i32
    %c0_i32 = arith.constant 0 : i32
    %c0_i32_0 = arith.constant 0 : i32
    %c0_i32_1 = arith.constant 0 : i32
    return %c0_i32, %1, %c0_i32_0 : i32, i32, i32
  }
  func.func @transform_1(%arg0: i32, %arg1: i32) -> (i32, i32, i32) {
    %c1_i32 = arith.constant 1 : i32
    %0 = arith.muli %arg0, %c1_i32 : i32
    %1 = arith.addi %0, %arg1 : i32
    %c0_i32 = arith.constant 0 : i32
    %c0_i32_0 = arith.constant 0 : i32
    %c0_i32_1 = arith.constant 0 : i32
    return %c0_i32, %1, %c0_i32_0 : i32, i32, i32
  }
  func.func @transform_2(%arg0: i32, %arg1: i32) -> (i32, i32, i32) {
    %c0_i32 = arith.constant 0 : i32
    %c0_i32_0 = arith.constant 0 : i32
    %c0_i32_1 = arith.constant 0 : i32
    return %arg0, %c0_i32, %c0_i32_0 : i32, i32, i32
  }
}

</mosaic_0001>

<llo_original>
// kernel: tpu_custom_call.1
$region0: #{tpu_custom_call.1}
  #allocation0 [shape = 'u32[]', space=smem, size = 0x4, offset = 0x4, fixed_abs, tag = 'smem constant byte address 0x4 - core index']
  #allocation1 [shape = 'u32[72,128]{1,0:T(1,128)}', space=vmem, size = 0x9000, scoped, tag = 'internal scratch']
  #allocation2 [shape = 'f32[2,8,128]{2,1,0:T(8,128)}', space=vmem, size = 0x2000, scoped, tag = 'scratch operand']
  %s0 = inlined_call_operand.hbm [shape: f32[2,8,128], index: 0, kind: input, shape index: {}]
  %s1 = inlined_call_operand.hbm [shape: f32[2,8,128], index: 1, kind: input, shape index: {}]
  %s2 = inlined_call_operand.hbm [shape: f32[1,2,128], index: 2, kind: output, shape index: {}]
  %s3 = sld [smem:[#allocation0]]
  $region34: #{tpu_custom_call.1} parent=0
    _
  %s5 = ssub.s32 1, %s3
  %s6 = scalar_select 0, %s5, %s3
  $region1: #{tpu_custom_call.1} parent=0
    #allocation3 [shape = 'u8[8192]{0}', space=vmem, size = 0x2000, scoped, tag = 'input window, operand 0, single buffered']
    #allocation4 [shape = 's32[1]{0}', space=sflag, size = 0x4, scoped, tag = 'scoped memory for tpu_custom_call.1']
    #allocation5 [shape = 's32[1]{0}', space=sflag, size = 0x4, scoped, tag = 'scoped memory for tpu_custom_call.1']
    #allocation6 [shape = 'u8[8192]{0}', space=vmem, size = 0x2000, scoped, tag = 'input window, operand 1, single buffered']
    #allocation7 [shape = 's32[1]{0}', space=sflag, size = 0x4, scoped, tag = 'scoped memory for tpu_custom_call.1']
    #allocation8 [shape = 'u8[1024]{0}', space=vmem, size = 0x400, scoped, tag = 'output window, operand 0, single buffered']
    %7 = vsyncpa [#allocation4], 0
    %8 = vsyncpa [#allocation7], 0
    %9 = vsyncpa [#allocation5], 0
    // Predicated region
    $region2: #{tpu_custom_call.1} parent=1 // pred_check
      _
    $region3: #{tpu_custom_call.1} parent=1 // pred_check_branch
      %11 = sbr.rel (0) target = $region5
    $region4: #{tpu_custom_call.1} parent=1 // pred_region
      %s12 = sadd.s32 0, 0
      %14 = vsyncadd [#allocation4], 0
      %s15 = smul.addr %s12, 8
      %s16 = scalar_lea.hbm %s0, %s15
      %s17 = sshll.u32 %s16, 4
      %s18 = int_to_ptr.hbm [resolvable:$true] %s17
      %s19 = sshll.u32 [#allocation3], 4
      %s20 = int_to_ptr.vmem [resolvable:$true] %s19
      %25 = dma.hbm_to_vmem [thread:$0]  %s18, 256, %s20, [#allocation4], 128, 128, 8
    $region5: #{tpu_custom_call.1} parent=1 // pred_fallthru
      _
    // Predicated region
    $region6: #{tpu_custom_call.1} parent=1 // pred_check
      _
    $region7: #{tpu_custom_call.1} parent=1 // pred_check_branch
      %27 = sbr.rel (0) target = $region9
    $region8: #{tpu_custom_call.1} parent=1 // pred_region
      %s28 = sadd.s32 0, 0
      %30 = vsyncadd [#allocation7], 0
      %s31 = smul.addr %s28, 8
      %s32 = scalar_lea.hbm %s1, %s31
      %s33 = sshll.u32 %s32, 4
      %s34 = int_to_ptr.hbm [resolvable:$true] %s33
      %s35 = sshll.u32 [#allocation6], 4
      %s36 = int_to_ptr.vmem [resolvable:$true] %s35
      %41 = dma.hbm_to_vmem [thread:$0]  %s34, 256, %s36, [#allocation7], 128, 128, 8
    $region9: #{tpu_custom_call.1} parent=1 // pred_fallthru
      _
    // Predicated region
    $region10: #{tpu_custom_call.1} parent=1 // pred_check
      _
    $region11: #{tpu_custom_call.1} parent=1 // pred_check_branch
      %43 = sbr.rel (0) target = $region13
    $region12: #{tpu_custom_call.1} parent=1 // pred_region
      %45 = dma.done [#allocation4], 256
    $region13: #{tpu_custom_call.1} parent=1 // pred_fallthru
      _
    // Predicated region
    $region14: #{tpu_custom_call.1} parent=1 // pred_check
      _
    $region15: #{tpu_custom_call.1} parent=1 // pred_check_branch
      %47 = sbr.rel (0) target = $region17
    $region16: #{tpu_custom_call.1} parent=1 // pred_region
      %49 = dma.done [#allocation7], 256
    $region17: #{tpu_custom_call.1} parent=1 // pred_fallthru
      _
    %s50 = sadd.s32 0, 0
    %s51 = sadd.s32 0, 0
    %p52 = scmp.eq.s32.totalorder 0, 0
    // Predicated region
    $region18: #{tpu_custom_call.1} parent=1 // pred_check
      %p53 = pneg %p52
    $region19: #{tpu_custom_call.1} parent=1 // pred_check_branch
      %55 = sbr.rel (%p53) target = $region21
    $region20: #{tpu_custom_call.1} parent=1 // pred_region
      %56 = vst [vmem:[#allocation2] sm:$0xff] 0.0
      %57 = vst [vmem:[#allocation2 + $0x8] sm:$0xff] 0.0
    $region21: #{tpu_custom_call.1} parent=1 // pred_fallthru
      _
    %v58 = vld [vmem:[#allocation6] sm:$0xff]
    %v59 = vld [vmem:[#allocation6 + $0x8] sm:$0xff]
    %v60 = vld [vmem:[#allocation3] sm:$0xff]
    %v61 = vld [vmem:[#allocation3 + $0x8] sm:$0xff]
    %v62 = vsub.f32 %v58, %v60
    %v63 = vsub.f32 %v59, %v61
    %v64 = vld [vmem:[#allocation2] sm:$0xff]
    %v65 = vld [vmem:[#allocation2 + $0x8] sm:$0xff]
    %v66 = vmul.f32 %v62, %v62
    %v67 = vmul.f32 %v63, %v63
    %v68 = vadd.f32 %v64, %v66
    %v69 = vadd.f32 %v65, %v67
    %70 = vst [vmem:[#allocation2] sm:$0xff] %v68
    %71 = vst [vmem:[#allocation2 + $0x8] sm:$0xff] %v69
    // Predicated region
    $region22: #{tpu_custom_call.1} parent=1 // pred_check
      %p72 = pneg %p52
    $region23: #{tpu_custom_call.1} parent=1 // pred_check_branch
      %74 = sbr.rel (%p72) target = $region25
    $region24: #{tpu_custom_call.1} parent=1 // pred_region
      %v75 = vld [vmem:[#allocation2] sm:$0xff]
      %v76 = vld [vmem:[#allocation2 + $0x8] sm:$0xff]
      %v77 = vrot.slane %v75, 4
      %v78 = vadd.f32 %v75, %v77
      %v79 = vrot.slane %v78, 2
      %v80 = vadd.f32 %v78, %v79
      %v81 = vrot.slane %v80, 1
      %v82 = vadd.f32 %v80, %v81
      %v83 = vrot.slane %v76, 4
      %v84 = vadd.f32 %v76, %v83
      %v85 = vrot.slane %v84, 2
      %v86 = vadd.f32 %v84, %v85
      %v87 = vrot.slane %v86, 1
      %v88 = vadd.f32 %v86, %v87
      %vm91 = vcmask 1041409
      %v92 = vsel %vm91, %v88, %v82
      %94 = vst [vmem:[#allocation8] sm:$0x3] %v92
    $region25: #{tpu_custom_call.1} parent=1 // pred_fallthru
      _
    // Predicated region
    $region26: #{tpu_custom_call.1} parent=1 // pred_check
      _
    $region27: #{tpu_custom_call.1} parent=1 // pred_check_branch
      %96 = sbr.rel (0) target = $region29
    $region28: #{tpu_custom_call.1} parent=1 // pred_region
      %98 = vsyncadd [#allocation5], 0
      %s100 = sshll.u32 [#allocation8], 4
      %s101 = int_to_ptr.vmem [resolvable:$true] %s100
      %s102 = sshll.u32 %s2, 4
      %s103 = int_to_ptr.hbm [resolvable:$true] %s102
      %105 = dma.vmem_to_hbm [thread:$0]  %s101, 32, %s103, [#allocation5]
    $region29: #{tpu_custom_call.1} parent=1 // pred_fallthru
      _
    // Predicated region
    $region30: #{tpu_custom_call.1} parent=1 // pred_check
      _
    $region31: #{tpu_custom_call.1} parent=1 // pred_check_branch
      %107 = sbr.rel (0) target = $region33
    $region32: #{tpu_custom_call.1} parent=1 // pred_region
      %109 = dma.done [#allocation5], 32
    $region33: #{tpu_custom_call.1} parent=1 // pred_fallthru
      _
    %110 = vsyncpa [#allocation4], 1
    %111 = vsyncpa [#allocation7], 1
    %112 = vsyncpa [#allocation5], 1

</llo_original>
